<compile_context>
chip_gen: v6e
topology: v6e:2x2x1
jax: 0.10.0
libtpu: 0.0.40
codegen_flags: <defaults>
</compile_context>

<pallas_src>
import jax
import jax.numpy as jnp
from jax import lax
from jax.experimental import pallas as pl
from jax.experimental.pallas import tpu as pltpu

_INV_SQRT2 = 0.7071067811865476
_BN_EPS = 1e-5


def _sparse_mlp_kernel(stats_ref, x_ref, wh_t_ref, ww_ref, bias_ref, o_ref):
    # stats_ref: SMEM (2,) f32 = [rstd, -mean*rstd]   (global BN statistics)
    # x_ref/o_ref: VMEM (W, H) — one batch element (B axis squeezed by BlockSpec)
    # wh_t_ref:   VMEM (H, H)  = (f1*wh + f0*I)^T
    # ww_ref:     VMEM (W, W)  = f2*ww
    # bias_ref:   VMEM (W, H)  = f1*bh[h] + f2*bw[w]
    scale = stats_ref[0]
    shift = stats_ref[1]

    # BatchNorm2d(1) apply (gamma=1, beta=0): xn = (x - mean) * rstd
    xn = x_ref[...] * scale + shift

    # nn.GELU() default = exact erf variant.
    y = 0.5 * xn * (1.0 + lax.erf(xn * _INV_SQRT2))                 # (W, H)

    # proj_h (fuse f1 and the f0*identity passthrough folded in), dense over H.
    xh = jnp.dot(y, wh_t_ref[...], preferred_element_type=jnp.float32)
    # proj_w (fuse f2 folded in), dense over W.
    xw = jnp.dot(ww_ref[...], y, preferred_element_type=jnp.float32)

    # fuse == plain sum (scalars already folded) + single precombined bias.
    o_ref[...] = xh + xw + bias_ref[...]


@jax.jit
def sparse_mlp(x, wh, bh, ww, bw, fw):
    """x: (B, W, H) f32. wh/bh: proj_h (H,H)/(H,). ww/bw: proj_w (W,W)/(W,).
    fw: fuse 1x1 conv weights, 3 scalars. Returns (B, W, H) f32."""
    B, W, H = x.shape
    f0, f1, f2 = fw[0], fw[1], fw[2]

    # --- global BN statistics, single pass (biased variance) -----------------
    n = x.size
    s = jnp.sum(x)
    ss = jnp.sum(jnp.square(x))
    mean = s / n
    var = jnp.maximum(ss / n - mean * mean, 0.0)
    rstd = lax.rsqrt(var + _BN_EPS)
    stats = jnp.stack([rstd, -mean * rstd]).astype(jnp.float32)      # (2,) SMEM

    # --- tiny weight/bias folding (batch-independent) ------------------------
    wh_eff_t = (f1 * wh + f0 * jnp.eye(H, dtype=wh.dtype)).T         # (H, H)
    ww_eff = f2 * ww                                                 # (W, W)
    bias = (f1 * bh).reshape(1, H) + (f2 * bw).reshape(W, 1)         # (W, H)
    # TODO(synk): at MXU-bound W/H, cast y/wh_eff_t/ww_eff to bf16 for the dots.

    out = pl.pallas_call(
        _sparse_mlp_kernel,
        out_shape=jax.ShapeDtypeStruct((B, W, H), jnp.float32),
        grid=(B,),
        in_specs=[
            pl.BlockSpec(memory_space=pltpu.MemorySpace.SMEM),        # stats (2,)
            pl.BlockSpec((None, W, H), lambda b: (b, 0, 0)),          # x block
            pl.BlockSpec((H, H), lambda b: (0, 0)),                   # wh_eff^T
            pl.BlockSpec((W, W), lambda b: (0, 0)),                   # ww_eff
            pl.BlockSpec((W, H), lambda b: (0, 0)),                   # bias slab
        ],
        out_specs=pl.BlockSpec((None, W, H), lambda b: (b, 0, 0)),
        compiler_params=pltpu.CompilerParams(
            dimension_semantics=("parallel",)),
    )(stats, x, wh_eff_t, ww_eff, bias)
    return out


def sparse_mlp_reference(x, wh, bh, ww, bw, fw):
    """Pure-JAX reference mirroring the PyTorch forward (unfolded weights)."""
    mean = jnp.mean(x)
    var = jnp.mean(jnp.square(x - mean))
    xn = (x - mean) / jnp.sqrt(var + _BN_EPS)
    y = 0.5 * xn * (1.0 + lax.erf(xn * _INV_SQRT2))
    x_h = jnp.einsum("bwi,oi->bwo", y, wh) + bh.reshape(1, 1, -1)
    x_w = jnp.einsum("oi,bih->boh", ww, y) + bw.reshape(1, -1, 1)
    return fw[0] * y + fw[1] * x_h + fw[2] * x_w


if __name__ == "__main__":
    # channels must be 1 for the module's cat/fuse shapes to be consistent.
    B, W, H, channels = 2, 16, 16, 1

    key = jax.random.PRNGKey(0)
    kx, k1, k2, k3, k4, k5 = jax.random.split(key, 6)

    x = jax.random.normal(kx, (B, W, H), dtype=jnp.float32)

    # Deterministic synthetic parameters (shapes from the module's __init__):
    # proj_h: Conv2d(H, H, 1x1) -> weight (H, H, 1, 1) kept as (H, H), bias (H,)
    wh = jax.random.normal(k1, (H, H), dtype=jnp.float32) * (1.0 / jnp.sqrt(H))
    bh = jax.random.normal(k2, (H,), dtype=jnp.float32) * 0.1
    # proj_w: Conv2d(W, W, 1x1) -> weight (W, W), bias (W,)
    ww = jax.random.normal(k3, (W, W), dtype=jnp.float32) * (1.0 / jnp.sqrt(W))
    bw = jax.random.normal(k4, (W,), dtype=jnp.float32) * 0.1
    # fuse: Conv2d(3*channels, channels, 1x1, bias=False) -> (1, 3, 1, 1) => 3 scalars
    fw = jax.random.normal(k5, (3 * channels,), dtype=jnp.float32) * (1.0 / jnp.sqrt(3.0))

    out = sparse_mlp(x, wh, bh, ww, bw, fw)
    out = jax.block_until_ready(out)

    ref = sparse_mlp_reference(x, wh, bh, ww, bw, fw)
    assert out.shape == (B, W, H)
    assert jnp.allclose(out, ref, atol=2e-4, rtol=2e-4), float(jnp.max(jnp.abs(out - ref)))

    print("KERNEL_OK")
</pallas_src>

<mosaic_0001>
module attributes {stable_mosaic.version = 11 : i64} {
  func.func @_sparse_mlp_kernel(%arg0: i32, %arg1: memref<2xf32, #tpu.memory_space<smem>>, %arg2: memref<1x16x16xf32, #tpu.memory_space<vmem>>, %arg3: memref<16x16xf32, #tpu.memory_space<vmem>>, %arg4: memref<16x16xf32, #tpu.memory_space<vmem>>, %arg5: memref<16x16xf32, #tpu.memory_space<vmem>>, %arg6: memref<1x16x16xf32, #tpu.memory_space<vmem>>) attributes {dimension_semantics = [#tpu.dimension_semantics<parallel>], iteration_bounds = array<i64: 2>, scalar_prefetch = 0 : i64, scratch_operands = 0 : i64, tpu.core_type = #tpu.core_type<tc>, window_params = [{transform_indices = @transform_0, window_bounds = array<i64: 2>}, {transform_indices = @transform_1, window_bounds = array<i64: 1, 16, 16>}, {pipeline_mode = #tpu.pipeline_mode<synchronous>, transform_indices = @transform_2, window_bounds = array<i64: 16, 16>}, {pipeline_mode = #tpu.pipeline_mode<synchronous>, transform_indices = @transform_3, window_bounds = array<i64: 16, 16>}, {pipeline_mode = #tpu.pipeline_mode<synchronous>, transform_indices = @transform_4, window_bounds = array<i64: 16, 16>}, {transform_indices = @transform_5, window_bounds = array<i64: 1, 16, 16>}]} {
    %c0 = arith.constant 0 : index
    %0 = memref.load %arg1[%c0] : memref<2xf32, #tpu.memory_space<smem>>
    %c1 = arith.constant 1 : index
    %1 = memref.load %arg1[%c1] : memref<2xf32, #tpu.memory_space<smem>>
    %c0_0 = arith.constant 0 : index
    %c0_1 = arith.constant 0 : index
    %c0_2 = arith.constant 0 : index
    %2 = vector.load %arg2[%c0_0, %c0_1, %c0_2] : memref<1x16x16xf32, #tpu.memory_space<vmem>>, vector<1x16x16xf32>
    %3 = vector.shape_cast %2 : vector<1x16x16xf32> to vector<16x16xf32>
    %4 = vector.broadcast %0 : f32 to vector<16x16xf32>
    %5 = arith.mulf %3, %4 : vector<16x16xf32>
    %6 = vector.broadcast %1 : f32 to vector<16x16xf32>
    %7 = arith.addf %5, %6 : vector<16x16xf32>
    %cst = arith.constant 5.000000e-01 : f32
    %8 = vector.broadcast %cst : f32 to vector<16x16xf32>
    %9 = arith.mulf %8, %7 : vector<16x16xf32>
    %cst_3 = arith.constant 0.707106769 : f32
    %10 = vector.broadcast %cst_3 : f32 to vector<16x16xf32>
    %11 = arith.mulf %7, %10 : vector<16x16xf32>
    %12 = math.erf %11 : vector<16x16xf32>
    %cst_4 = arith.constant 1.000000e+00 : f32
    %13 = vector.broadcast %cst_4 : f32 to vector<16x16xf32>
    %14 = arith.addf %13, %12 : vector<16x16xf32>
    %15 = arith.mulf %9, %14 : vector<16x16xf32>
    %c0_5 = arith.constant 0 : index
    %c0_6 = arith.constant 0 : index
    %16 = vector.load %arg3[%c0_5, %c0_6] : memref<16x16xf32, #tpu.memory_space<vmem>>, vector<16x16xf32>
    %cst_7 = arith.constant dense<0.000000e+00> : vector<16x16xf32>
    %17 = tpu.matmul %15, %16, %cst_7 {dimension_numbers = #tpu.dot_dimension_numbers<[1], [0], [0], [1], [0, 0, 1, 1], [], []>} : vector<16x16xf32>, vector<16x16xf32>, vector<16x16xf32> -> vector<16x16xf32>
    %c0_8 = arith.constant 0 : index
    %c0_9 = arith.constant 0 : index
    %18 = vector.load %arg4[%c0_8, %c0_9] : memref<16x16xf32, #tpu.memory_space<vmem>>, vector<16x16xf32>
    %cst_10 = arith.constant dense<0.000000e+00> : vector<16x16xf32>
    %19 = tpu.matmul %18, %15, %cst_10 {dimension_numbers = #tpu.dot_dimension_numbers<[1], [0], [0], [1], [0, 0, 1, 1], [], []>} : vector<16x16xf32>, vector<16x16xf32>, vector<16x16xf32> -> vector<16x16xf32>
    %20 = arith.addf %17, %19 : vector<16x16xf32>
    %c0_11 = arith.constant 0 : index
    %c0_12 = arith.constant 0 : index
    %21 = vector.load %arg5[%c0_11, %c0_12] : memref<16x16xf32, #tpu.memory_space<vmem>>, vector<16x16xf32>
    %22 = arith.addf %20, %21 : vector<16x16xf32>
    %c0_13 = arith.constant 0 : index
    %c0_14 = arith.constant 0 : index
    %c0_15 = arith.constant 0 : index
    %23 = vector.load %arg6[%c0_13, %c0_14, %c0_15] : memref<1x16x16xf32, #tpu.memory_space<vmem>>, vector<1x16x16xf32>
    %24 = vector.shape_cast %23 : vector<1x16x16xf32> to vector<16x16xf32>
    %25 = vector.shape_cast %22 : vector<16x16xf32> to vector<1x16x16xf32>
    tpu.vector_store %arg6[%c0_13, %c0_14, %c0_15], %25 {strides = array<i32>} : memref<1x16x16xf32, #tpu.memory_space<vmem>>, vector<1x16x16xf32>,
    return
  }
  func.func @transform_0(%arg0: i32) -> i32 {
    %c0_i32 = arith.constant 0 : i32
    %c0_i32_0 = arith.constant 0 : i32
    return %c0_i32 : i32
  }
  func.func @transform_1(%arg0: i32) -> (i32, i32, i32) {
    %c0_i32 = arith.constant 0 : i32
    %c0_i32_0 = arith.constant 0 : i32
    %c0_i32_1 = arith.constant 0 : i32
    return %arg0, %c0_i32, %c0_i32_0 : i32, i32, i32
  }
  func.func @transform_2(%arg0: i32) -> (i32, i32) {
    %c0_i32 = arith.constant 0 : i32
    %c0_i32_0 = arith.constant 0 : i32
    %c0_i32_1 = arith.constant 0 : i32
    return %c0_i32, %c0_i32_0 : i32, i32
  }
  func.func @transform_3(%arg0: i32) -> (i32, i32) {
    %c0_i32 = arith.constant 0 : i32
    %c0_i32_0 = arith.constant 0 : i32
    %c0_i32_1 = arith.constant 0 : i32
    return %c0_i32, %c0_i32_0 : i32, i32
  }
  func.func @transform_4(%arg0: i32) -> (i32, i32) {
    %c0_i32 = arith.constant 0 : i32
    %c0_i32_0 = arith.constant 0 : i32
    %c0_i32_1 = arith.constant 0 : i32
    return %c0_i32, %c0_i32_0 : i32, i32
  }
  func.func @transform_5(%arg0: i32) -> (i32, i32, i32) {
    %c0_i32 = arith.constant 0 : i32
    %c0_i32_0 = arith.constant 0 : i32
    %c0_i32_1 = arith.constant 0 : i32
    return %arg0, %c0_i32, %c0_i32_0 : i32, i32, i32
  }
}

</mosaic_0001>

<llo_original>
// kernel: sparse_mlp.1
$region0: #{sparse_mlp.1}
  #allocation0 [shape = 'u32[]', space=smem, size = 0x4, offset = 0x4, fixed_abs, tag = 'smem constant byte address 0x4 - core index']
  #allocation1 [shape = 'u32[144,128]{1,0:T(1,128)}', space=vmem, size = 0x12000, scoped, tag = 'internal scratch']
  %s0 = inlined_call_operand.vmem [shape: f32[2], index: 0, kind: input, shape index: {}]
  %s1 = inlined_call_operand.vmem [shape: f32[2,16,16], index: 1, kind: input, shape index: {}]
  %s2 = inlined_call_operand.vmem [shape: f32[16,16], index: 2, kind: input, shape index: {}]
  %s3 = inlined_call_operand.vmem [shape: f32[16,16], index: 3, kind: input, shape index: {}]
  %s4 = inlined_call_operand.vmem [shape: f32[16,16], index: 4, kind: input, shape index: {}]
  %s5 = inlined_call_operand.hbm [shape: f32[2,16,16], index: 5, kind: output, shape index: {}]
  %s6 = sld [smem:[#allocation0]]
  $region57: #{sparse_mlp.1} parent=0
    _
  %s8 = ssub.s32 1, %s6
  %s9 = scalar_select 0, %s8, %s6
  $region1: #{sparse_mlp.1} parent=0
    #allocation2 [shape = 'u8[512]{0}', space=smem, size = 0x200, scoped, tag = 'input window, operand 0, single buffered']
    #allocation3 [shape = 's32[2]{0}', space=sflag, size = 0x8, scoped, tag = 'scoped memory for sparse_mlp.1']
    #allocation4 [shape = 's32[2]{0}', space=sflag, size = 0x8, scoped, tag = 'scoped memory for sparse_mlp.1']
    #allocation5 [shape = 'u8[16384]{0}', space=vmem, size = 0x4000, scoped, tag = 'output window, operand 0']
    %10 = vsyncpa [#allocation4], 0
    %11 = vsyncpa [#allocation3], 0
    %s12 = scalar_lea.sflag [#allocation3], 1
    %13 = vsyncpa %s12, 0
    loop: start=0, step=1, limit=4
    $region2: #{sparse_mlp.1} parent=1 // loop_pre_header
      _
    $region3: #{sparse_mlp.1} parent=1 // loop_header
      %s15 = sphi 0, %s19
      %p16 = scmp.ge.s32.totalorder %s15, 4
      %s23 = sphi 0, %s23
      %s25 = sphi 0, %s23
      %s26 = sphi 0, %s25
      %s40 = sphi 0, %s26
      %s46 = sphi 0, %s48
      %s49 = sphi 0, %s46
      %s50 = sphi 0, %s49
      %s66 = sphi 0, %s50
      %s70 = sphi 0, %s70
      %s72 = sphi 0, %s70
      %s73 = sphi 0, %s72
      %s87 = sphi 0, %s73
      %s91 = sphi 0, %s91
      %s93 = sphi 0, %s91
      %s94 = sphi 0, %s93
      %s108 = sphi 0, %s94
      %s112 = sphi 0, %s112
      %s114 = sphi 0, %s112
      %s115 = sphi 0, %s114
      %s129 = sphi 0, %s115
      %s135 = sphi 0, %s137
      %s138 = sphi 0, %s135
      %s139 = sphi 0, %s138
      %s155 = sphi 0, %s139
    $region4: #{sparse_mlp.1} parent=1 // loop_header_branch
      %18 = sbr.rel (%p16) target = $region8
    $region5: #{sparse_mlp.1} parent=1 // loop_body
      %s20 = ssub.s32 %s15, 1
      %s21 = ssub.s32 %s15, 2
      %s22 = sadd.s32 %s15, 1
      %s24 = sadd.s32 %s23, 1
      %p27 = scmp.eq.s32.totalorder %s15, 1
      %p28 = scmp.ne.s32.totalorder %s23, %s25
      %p29 = scmp.eq.s32.totalorder %s15, 0
      %p30 = por %p28, %p29
      %p31 = scmp.ne.s32.totalorder %s23, %s25
      %p32 = scmp.eq.s32.totalorder %s20, 1
      %p33 = por %p31, %p32
      %p34 = scmp.ne.s32.totalorder %s25, %s26
      %p35 = scmp.eq.s32.totalorder %s20, 0
      %p36 = por %p34, %p35
      %p37 = scmp.ne.s32.totalorder %s25, %s26
      %p38 = scmp.eq.s32.totalorder %s21, 1
      %p39 = por %p37, %p38
      %p41 = scmp.ne.s32.totalorder %s26, %s40
      %p42 = scmp.eq.s32.totalorder %s21, 0
      %p43 = por %p41, %p42
      %s44 = ssub.s32 %s15, %s22
      %p45 = scmp.eq.s32.totalorder %s44, 0
      %s47 = sadd.s32 %s46, 1
      %s48 = scalar_select %p45, %s46, %s47
      %p51 = pneg %p45
      %p52 = scmp.eq.s32.totalorder %s15, 1
      %p53 = por %p51, %p52
      %p54 = scmp.ne.s32.totalorder %s46, %s49
      %p55 = scmp.eq.s32.totalorder %s15, 0
      %p56 = por %p54, %p55
      %p57 = scmp.ne.s32.totalorder %s46, %s49
      %p58 = scmp.eq.s32.totalorder %s20, 1
      %p59 = por %p57, %p58
      %p60 = scmp.ne.s32.totalorder %s49, %s50
      %p61 = scmp.eq.s32.totalorder %s20, 0
      %p62 = por %p60, %p61
      %p63 = scmp.ne.s32.totalorder %s49, %s50
      %p64 = scmp.eq.s32.totalorder %s21, 1
      %p65 = por %p63, %p64
      %p67 = scmp.ne.s32.totalorder %s50, %s66
      %p68 = scmp.eq.s32.totalorder %s21, 0
      %p69 = por %p67, %p68
      %s71 = sadd.s32 %s70, 1
      %p74 = scmp.eq.s32.totalorder %s15, 1
      %p75 = scmp.ne.s32.totalorder %s70, %s72
      %p76 = scmp.eq.s32.totalorder %s15, 0
      %p77 = por %p75, %p76
      %p78 = scmp.ne.s32.totalorder %s70, %s72
      %p79 = scmp.eq.s32.totalorder %s20, 1
      %p80 = por %p78, %p79
      %p81 = scmp.ne.s32.totalorder %s72, %s73
      %p82 = scmp.eq.s32.totalorder %s20, 0
      %p83 = por %p81, %p82
      %p84 = scmp.ne.s32.totalorder %s72, %s73
      %p85 = scmp.eq.s32.totalorder %s21, 1
      %p86 = por %p84, %p85
      %p88 = scmp.ne.s32.totalorder %s73, %s87
      %p89 = scmp.eq.s32.totalorder %s21, 0
      %p90 = por %p88, %p89
      %s92 = sadd.s32 %s91, 1
      %p95 = scmp.eq.s32.totalorder %s15, 1
      %p96 = scmp.ne.s32.totalorder %s91, %s93
      %p97 = scmp.eq.s32.totalorder %s15, 0
      %p98 = por %p96, %p97
      %p99 = scmp.ne.s32.totalorder %s91, %s93
      %p100 = scmp.eq.s32.totalorder %s20, 1
      %p101 = por %p99, %p100
      %p102 = scmp.ne.s32.totalorder %s93, %s94
      %p103 = scmp.eq.s32.totalorder %s20, 0
      %p104 = por %p102, %p103
      %p105 = scmp.ne.s32.totalorder %s93, %s94
      %p106 = scmp.eq.s32.totalorder %s21, 1
      %p107 = por %p105, %p106
      %p109 = scmp.ne.s32.totalorder %s94, %s108
      %p110 = scmp.eq.s32.totalorder %s21, 0
      %p111 = por %p109, %p110
      %s113 = sadd.s32 %s112, 1
      %p116 = scmp.eq.s32.totalorder %s15, 1
      %p117 = scmp.ne.s32.totalorder %s112, %s114
      %p118 = scmp.eq.s32.totalorder %s15, 0
      %p119 = por %p117, %p118
      %p120 = scmp.ne.s32.totalorder %s112, %s114
      %p121 = scmp.eq.s32.totalorder %s20, 1
      %p122 = por %p120, %p121
      %p123 = scmp.ne.s32.totalorder %s114, %s115
      %p124 = scmp.eq.s32.totalorder %s20, 0
      %p125 = por %p123, %p124
      %p126 = scmp.ne.s32.totalorder %s114, %s115
      %p127 = scmp.eq.s32.totalorder %s21, 1
      %p128 = por %p126, %p127
      %p130 = scmp.ne.s32.totalorder %s115, %s129
      %p131 = scmp.eq.s32.totalorder %s21, 0
      %p132 = por %p130, %p131
      %s133 = ssub.s32 %s15, %s22
      %p134 = scmp.eq.s32.totalorder %s133, 0
      %s136 = sadd.s32 %s135, 1
      %s137 = scalar_select %p134, %s135, %s136
      %p140 = pneg %p134
      %p141 = scmp.eq.s32.totalorder %s15, 1
      %p142 = por %p140, %p141
      %p143 = scmp.ne.s32.totalorder %s135, %s138
      %p144 = scmp.eq.s32.totalorder %s15, 0
      %p145 = por %p143, %p144
      %p146 = scmp.ne.s32.totalorder %s135, %s138
      %p147 = scmp.eq.s32.totalorder %s20, 1
      %p148 = por %p146, %p147
      %p149 = scmp.ne.s32.totalorder %s138, %s139
      %p150 = scmp.eq.s32.totalorder %s20, 0
      %p151 = por %p149, %p150
      %p152 = scmp.ne.s32.totalorder %s138, %s139
      %p153 = scmp.eq.s32.totalorder %s21, 1
      %p154 = por %p152, %p153
      %p156 = scmp.ne.s32.totalorder %s139, %s155
      %p157 = scmp.eq.s32.totalorder %s21, 0
      %p158 = por %p156, %p157
      %p159 = scmp.le.s32.totalorder 1, %s15
      %p160 = scmp.lt.s32.totalorder %s15, 3
      %p161 = pnand %p159, %p160
      %p162 = pneg %p161
      // Predicated region
      $region9: #{sparse_mlp.1} parent=5 // pred_check
        _
      $region10: #{sparse_mlp.1} parent=5 // pred_check_branch
        %164 = sbr.rel (%p161) target = $region12
      $region11: #{sparse_mlp.1} parent=5 // pred_region
        %s165 = ssub.s32 %s15, 1
        // Predicated region
        $region13: #{sparse_mlp.1} parent=11 // pred_check
          %p166 = pneg %p36
        $region14: #{sparse_mlp.1} parent=11 // pred_check_branch
          %168 = sbr.rel (%p166) target = $region16
        $region15: #{sparse_mlp.1} parent=11 // pred_region
          %s170 = ssub.s32 16, 16
          %171 = vsyncadd [#allocation4], %s170
          %s173 = sshll.u32 %s0, 4
          %s174 = int_to_ptr.vmem [resolvable:$true] %s173
          %176 = dma.vmem_to_smem %s174, 16, [#allocation2], [#allocation4]
        $region16: #{sparse_mlp.1} parent=11 // pred_fallthru
          _
        // Predicated region
        $region17: #{sparse_mlp.1} parent=11 // pred_check
          %p177 = pneg %p83
        $region18: #{sparse_mlp.1} parent=11 // pred_check_branch
          %179 = sbr.rel (%p177) target = $region20
        $region19: #{sparse_mlp.1} parent=11 // pred_region
          _
        $region20: #{sparse_mlp.1} parent=11 // pred_fallthru
          _
        // Predicated region
        $region21: #{sparse_mlp.1} parent=11 // pred_check
          %p180 = pneg %p104
        $region22: #{sparse_mlp.1} parent=11 // pred_check_branch
          %182 = sbr.rel (%p180) target = $region24
        $region23: #{sparse_mlp.1} parent=11 // pred_region
          _
        $region24: #{sparse_mlp.1} parent=11 // pred_fallthru
          _
        // Predicated region
        $region25: #{sparse_mlp.1} parent=11 // pred_check
          %p183 = pneg %p125
        $region26: #{sparse_mlp.1} parent=11 // pred_check_branch
          %185 = sbr.rel (%p183) target = $region28
        $region27: #{sparse_mlp.1} parent=11 // pred_region
          _
        $region28: #{sparse_mlp.1} parent=11 // pred_fallthru
          _
      $region12: #{sparse_mlp.1} parent=5 // pred_fallthru
        _
      %p186 = scmp.lt.s32.totalorder %s15, 2
      // Predicated region
      $region29: #{sparse_mlp.1} parent=5 // pred_check
        %p187 = pneg %p186
      $region30: #{sparse_mlp.1} parent=5 // pred_check_branch
        %189 = sbr.rel (%p187) target = $region32
      $region31: #{sparse_mlp.1} parent=5 // pred_region
        // Predicated region
        $region33: #{sparse_mlp.1} parent=31 // pred_check
          %p190 = pneg %p56
        $region34: #{sparse_mlp.1} parent=31 // pred_check_branch
          %192 = sbr.rel (%p190) target = $region36
        $region35: #{sparse_mlp.1} parent=31 // pred_region
          %p193 = scmp.lt.s32.totalorder %s15, 1
          %s194 = scalar_select %p193, %s15, 1
          %s195 = smul.addr %s194, 2
          %s196 = smul.addr %s195, 8
          %s197 = scalar_lea.vmem %s1, %s196
        $region36: #{sparse_mlp.1} parent=31 // pred_fallthru
          _
      $region32: #{sparse_mlp.1} parent=5 // pred_fallthru
        _
      %p198 = scmp.le.s32.totalorder 1, %s15
      %p199 = scmp.lt.s32.totalorder %s15, 3
      %p200 = pnand %p198, %p199
      %p201 = pneg %p200
      // Predicated region
      $region37: #{sparse_mlp.1} parent=5 // pred_check
        _
      $region38: #{sparse_mlp.1} parent=5 // pred_check_branch
        %203 = sbr.rel (%p200) target = $region40
      $region39: #{sparse_mlp.1} parent=5 // pred_region
        %s204 = ssub.s32 %s15, 1
        // Predicated region
        $region41: #{sparse_mlp.1} parent=39 // pred_check
          %p205 = pneg %p36
        $region42: #{sparse_mlp.1} parent=39 // pred_check_branch
          %207 = sbr.rel (%p205) target = $region44
        $region43: #{sparse_mlp.1} parent=39 // pred_region
          %208 = dma.done [#allocation4], 16
        $region44: #{sparse_mlp.1} parent=39 // pred_fallthru
          _
        %209 = sfence
        %p210 = pneg %p36
        %p211 = pneg %p33
        %p212 = scmp.lt.s32.totalorder %s20, 1
        %s213 = scalar_select %p212, %s20, 1
        %s214 = smul.addr %s213, 2
        %s215 = smul.addr %s214, 8
        %s216 = scalar_lea.vmem %s1, %s215
        %p217 = pneg %p62
        %p218 = pneg %p59
        %p219 = pneg %p83
        %p220 = pneg %p80
        %p221 = pneg %p104
        %p222 = pneg %p101
        %p223 = pneg %p125
        %p224 = pneg %p122
        %p225 = pneg %p151
        %p226 = pneg %p148
        %s227 = sand.u32 %s138, 1
        %s228 = scalar_lea.sflag [#allocation3], %s227
        %s229 = sand.u32 %s138, 1
        %s230 = smul.addr %s229, 16
        %s231 = scalar_lea.vmem [#allocation5], %s230
        %p232 = scmp.lt.s32.totalorder %s20, 1
        %s233 = scalar_select %p232, %s20, 1
        %s234 = smul.addr %s233, 2
        %s235 = smul.addr %s234, 8
        %s236 = scalar_lea.vmem %s1, %s235
        %s237 = sld [smem:[#allocation2]]
        %s238 = sld [smem:[#allocation2 + $0x1]]
        %v239 = vld [vmem:[%s236] sm:$0xff]
        %v240 = vld [vmem:[%s236 + $0x8] sm:$0xff]
        %v241 = vstv %s237
        %v242 = vmul.f32 %v239, %v241
        %v243 = vmul.f32 %v240, %v241
        %v244 = vstv %s238
        %v245 = vadd.f32 %v242, %v244
        %v246 = vadd.f32 %v243, %v244
        %v247 = vmul.f32 %v245, 0.5
        %v248 = vmul.f32 %v246, 0.5
        %v249 = vmul.f32 %v245, 0.70710677
        %v250 = vmul.f32 %v246, 0.70710677
        %v251 = verf.f32.pop %v249
        %v252 = verf.f32.pop %v250
        %v253 = vadd.f32 %v251, 1.0
        %v254 = vadd.f32 %v252, 1.0
        %v255 = vmul.f32 %v247, %v253
        %v256 = vmul.f32 %v248, %v254
        %v257 = vld [vmem:[%s2] sm:$0xff]
        %v258 = vld [vmem:[%s2 + $0x8] sm:$0xff]
        %v259 = vld [vmem:[%s3] sm:$0xff]
        %v260 = vld [vmem:[%s3 + $0x8] sm:$0xff]
        %vm261 = vcmask 130048
        %v263 = vsel %vm261, %v259, 0
        %v266 = vsel %vm261, %v260, 0
        %268 = vmatprep.subr.mxu0 0.0
        %269 = vmatpush1.msra.mxu0 0.0
        %270 = vmatprep.subr.mxu0 0.0
        %271 = vmatpush1.msra.mxu0 0.0
        %272 = vmatprep.subr.mxu0 0.0
        %273 = vmatpush1.msra.mxu0 0.0
        %274 = vmatprep.subr.mxu0 0.0
        %275 = vmatpush1.msra.mxu0 0.0
        %276 = vmatprep.subr.mxu0 0.0
        %277 = vmatpush1.msra.mxu0 0.0
        %278 = vmatprep.subr.mxu0 0.0
        %279 = vmatpush1.msra.mxu0 0.0
        %280 = vmatprep.subr.mxu0 0.0
        %281 = vmatpush1.msra.mxu0 0.0
        %282 = vmatprep.subr.mxu0 0.0
        %283 = vmatpush1.msra.mxu0 0.0
        %284 = vmatprep.subr.mxu0 0.0
        %285 = vmatpush1.msra.mxu0 0.0
        %286 = vmatprep.subr.mxu0 0.0
        %287 = vmatpush1.msra.mxu0 0.0
        %288 = vmatprep.subr.mxu0 0.0
        %289 = vmatpush1.msra.mxu0 0.0
        %290 = vmatprep.subr.mxu0 0.0
        %291 = vmatpush1.msra.mxu0 0.0
        %292 = vmatprep.subr.mxu0 0.0
        %293 = vmatpush1.msra.mxu0 0.0
        %294 = vmatprep.subr.mxu0 0.0
        %295 = vmatpush1.msra.mxu0 0.0
        %296 = vmatprep.subr.mxu0 0.0
        %297 = vmatpush1.msra.mxu0 %v256
        %298 = vmatprep.subr.mxu0 0.0
        %299 = vmatpush1.msra.mxu0 %v255
        %300 = vmatprep.subr.mxu0 0.0
        %301 = vmatpush2.msra.mxu0 0.0
        %302 = vmatprep.subr.mxu0 0.0
        %303 = vmatpush2.msra.mxu0 0.0
        %304 = vmatprep.subr.mxu0 0.0
        %305 = vmatpush2.msra.mxu0 0.0
        %306 = vmatprep.subr.mxu0 0.0
        %307 = vmatpush2.msra.mxu0 0.0
        %308 = vmatprep.subr.mxu0 0.0
        %309 = vmatpush2.msra.mxu0 0.0
        %310 = vmatprep.subr.mxu0 0.0
        %311 = vmatpush2.msra.mxu0 0.0
        %312 = vmatprep.subr.mxu0 0.0
        %313 = vmatpush2.msra.mxu0 0.0
        %314 = vmatprep.subr.mxu0 0.0
        %315 = vmatpush2.msra.mxu0 0.0
        %316 = vmatprep.subr.mxu0 0.0
        %317 = vmatpush2.msra.mxu0 0.0
        %318 = vmatprep.subr.mxu0 0.0
        %319 = vmatpush2.msra.mxu0 0.0
        %320 = vmatprep.subr.mxu0 0.0
        %321 = vmatpush2.msra.mxu0 0.0
        %322 = vmatprep.subr.mxu0 0.0
        %323 = vmatpush2.msra.mxu0 0.0
        %324 = vmatprep.subr.mxu0 0.0
        %325 = vmatpush2.msra.mxu0 0.0
        %326 = vmatprep.subr.mxu0 0.0
        %327 = vmatpush2.msra.mxu0 0.0
        %328 = vmatprep.subr.mxu0 0.0
        %329 = vmatpush2.msra.mxu0 0.0
        %330 = vmatprep.subr.mxu0 0.0
        %331 = vmatpush2.msra.mxu0 0.0
        %332 = vmatprep.mubr.f32.mxu0 0.0
        %333 = vmatmul.mubr.f32.gmra.mxu0 %v263
        %v334 = vpop.f32.mrf.mxu0
        %v335 = vadd.f32 0.0, %v334
        %v336 = vpop.f32.mrf.mxu0
        %337 = vmatprep.mubr.f32.mxu0 0.0
        %338 = vmatmul.mubr.f32.gmra.mxu0 %v266
        %v339 = vpop.f32.mrf.mxu0
        %v340 = vadd.f32 0.0, %v339
        %v341 = vpop.f32.mrf.mxu0
        %342 = vdwg.mxu0
        %v344 = vsel %vm261, %v255, 0
        %v347 = vsel %vm261, %v256, 0
        %349 = vmatprep.subr.mxu0 0.0
        %350 = vmatpush1.msra.mxu0 0.0
        %351 = vmatprep.subr.mxu0 0.0
        %352 = vmatpush1.msra.mxu0 0.0
        %353 = vmatprep.subr.mxu0 0.0
        %354 = vmatpush1.msra.mxu0 0.0
        %355 = vmatprep.subr.mxu0 0.0
        %356 = vmatpush1.msra.mxu0 0.0
        %357 = vmatprep.subr.mxu0 0.0
        %358 = vmatpush1.msra.mxu0 0.0
        %359 = vmatprep.subr.mxu0 0.0
        %360 = vmatpush1.msra.mxu0 0.0
        %361 = vmatprep.subr.mxu0 0.0
        %362 = vmatpush1.msra.mxu0 0.0
        %363 = vmatprep.subr.mxu0 0.0
        %364 = vmatpush1.msra.mxu0 0.0
        %365 = vmatprep.subr.mxu0 0.0
        %366 = vmatpush1.msra.mxu0 0.0
        %367 = vmatprep.subr.mxu0 0.0
        %368 = vmatpush1.msra.mxu0 0.0
        %369 = vmatprep.subr.mxu0 0.0
        %370 = vmatpush1.msra.mxu0 0.0
        %371 = vmatprep.subr.mxu0 0.0
        %372 = vmatpush1.msra.mxu0 0.0
        %373 = vmatprep.subr.mxu0 0.0
        %374 = vmatpush1.msra.mxu0 0.0
        %375 = vmatprep.subr.mxu0 0.0
        %376 = vmatpush1.msra.mxu0 0.0
        %377 = vmatprep.subr.mxu0 0.0
        %378 = vmatpush1.msra.mxu0 %v258
        %379 = vmatprep.subr.mxu0 0.0
        %380 = vmatpush1.msra.mxu0 %v257
        %381 = vmatprep.subr.mxu0 0.0
        %382 = vmatpush2.msra.mxu0 0.0
        %383 = vmatprep.subr.mxu0 0.0
        %384 = vmatpush2.msra.mxu0 0.0
        %385 = vmatprep.subr.mxu0 0.0
        %386 = vmatpush2.msra.mxu0 0.0
        %387 = vmatprep.subr.mxu0 0.0
        %388 = vmatpush2.msra.mxu0 0.0
        %389 = vmatprep.subr.mxu0 0.0
        %390 = vmatpush2.msra.mxu0 0.0
        %391 = vmatprep.subr.mxu0 0.0
        %392 = vmatpush2.msra.mxu0 0.0
        %393 = vmatprep.subr.mxu0 0.0
        %394 = vmatpush2.msra.mxu0 0.0
        %395 = vmatprep.subr.mxu0 0.0
        %396 = vmatpush2.msra.mxu0 0.0
        %397 = vmatprep.subr.mxu0 0.0
        %398 = vmatpush2.msra.mxu0 0.0
        %399 = vmatprep.subr.mxu0 0.0
        %400 = vmatpush2.msra.mxu0 0.0
        %401 = vmatprep.subr.mxu0 0.0
        %402 = vmatpush2.msra.mxu0 0.0
        %403 = vmatprep.subr.mxu0 0.0
        %404 = vmatpush2.msra.mxu0 0.0
        %405 = vmatprep.subr.mxu0 0.0
        %406 = vmatpush2.msra.mxu0 0.0
        %407 = vmatprep.subr.mxu0 0.0
        %408 = vmatpush2.msra.mxu0 0.0
        %409 = vmatprep.subr.mxu0 0.0
        %410 = vmatpush2.msra.mxu0 0.0
        %411 = vmatprep.subr.mxu0 0.0
        %412 = vmatpush2.msra.mxu0 0.0
        %413 = vmatprep.mubr.f32.mxu0 0.0
        %414 = vmatmul.mubr.f32.gmra.mxu0 %v344
        %v415 = vpop.f32.mrf.mxu0
        %v416 = vadd.f32 %v335, %v415
        %v417 = vpop.f32.mrf.mxu0
        %418 = vmatprep.mubr.f32.mxu0 0.0
        %419 = vmatmul.mubr.f32.gmra.mxu0 %v347
        %v420 = vpop.f32.mrf.mxu0
        %v421 = vadd.f32 %v340, %v420
        %v422 = vpop.f32.mrf.mxu0
        %423 = vdwg.mxu0
        %v424 = vld [vmem:[%s4] sm:$0xff]
        %v425 = vld [vmem:[%s4 + $0x8] sm:$0xff]
        %v426 = vadd.f32 %v416, %v424
        %v427 = vadd.f32 %v421, %v425
        %428 = vst.msk [vmem:[%s231] sm:$0xff] %vm261, %v426
        %429 = vst.msk [vmem:[%s231 + $0x8] sm:$0xff] %vm261, %v427
        %s430 = sand.u32 %s138, 1
        %s431 = scalar_lea.sflag [#allocation3], %s430
        %s432 = sand.u32 %s138, 1
        %s433 = smul.addr %s432, 16
        %s434 = scalar_lea.vmem [#allocation5], %s433
        // Predicated region
        $region45: #{sparse_mlp.1} parent=39 // pred_check
          %p435 = pneg %p148
        $region46: #{sparse_mlp.1} parent=39 // pred_check_branch
          %437 = sbr.rel (%p435) target = $region48
        $region47: #{sparse_mlp.1} parent=39 // pred_region
          %s439 = ssub.s32 256, 256
          %440 = vsyncadd %s431, %s439
          %s441 = smul.addr %s20, 2
          %s442 = smul.addr %s441, 128
          %s443 = scalar_lea.hbm %s5, %s442
          %s444 = sshll.u32 %s434, 4
          %s445 = int_to_ptr.vmem [resolvable:$true] %s444
          %450 = dma.vmem_to_hbm [thread:$0]  %s445, 256, %s443, %s431, 128, 128, 8
        $region48: #{sparse_mlp.1} parent=39 // pred_fallthru
          _
      $region40: #{sparse_mlp.1} parent=5 // pred_fallthru
        _
      %p451 = scmp.le.s32.totalorder 2, %s15
      // Predicated region
      $region49: #{sparse_mlp.1} parent=5 // pred_check
        %p452 = pneg %p451
      $region50: #{sparse_mlp.1} parent=5 // pred_check_branch
        %454 = sbr.rel (%p452) target = $region52
      $region51: #{sparse_mlp.1} parent=5 // pred_region
        %s455 = ssub.s32 %s15, 2
        // Predicated region
        $region53: #{sparse_mlp.1} parent=51 // pred_check
          %p456 = pneg %p154
        $region54: #{sparse_mlp.1} parent=51 // pred_check_branch
          %458 = sbr.rel (%p456) target = $region56
        $region55: #{sparse_mlp.1} parent=51 // pred_region
          %s459 = sand.u32 %s139, 1
          %s460 = scalar_lea.sflag [#allocation3], %s459
          %s461 = sand.u32 %s139, 1
          %s462 = smul.addr %s461, 16
          %s463 = scalar_lea.vmem [#allocation5], %s462
          %464 = dma.done %s460, 256
        $region56: #{sparse_mlp.1} parent=51 // pred_fallthru
          _
      $region52: #{sparse_mlp.1} parent=5 // pred_fallthru
        _
    $region6: #{sparse_mlp.1} parent=1 // loop_footer
      %s19 = sadd.s32 1, %s15
    $region7: #{sparse_mlp.1} parent=1 // loop_footer_branch
      %14 = sbr.rel target = $region3
    $region8: #{sparse_mlp.1} parent=1 // loop_exit
      _
    %465 = vsyncpa [#allocation3], 1
    %s466 = scalar_lea.sflag [#allocation3], 1
    %467 = vsyncpa %s466, 1
    %468 = vsyncpa [#allocation4], 1
    %s469 = scalar_lea.sflag [#allocation4], 1
    %470 = vsyncpa %s469, 1

</llo_original>
